<compile_context>
chip_gen: v5e
topology: v5e:2x2
jax: 0.10.0
libtpu: 0.0.40
codegen_flags: <defaults>
</compile_context>

<pallas_src>
import numpy as np
import jax
import jax.numpy as jnp
from jax.experimental import pallas as pl
from jax.experimental.pallas import tpu as pltpu


def _round_up(x, m):
    return (x + m - 1) // m * m


# ----------------------------- Pallas kernel ------------------------------ #

def _avgpool_readout_kernel(w_ref, v_ref, out_ref):
    # w_ref:   (Bt, E)    f32       fused mask * per-graph scale
    # v_ref:   (Bt, E, D) f32/bf16  values (padded slots finite; mask lives in w)
    # out_ref: (Bt, D)    f32
    v = v_ref[...].astype(jnp.float32)             # upcast: v5e VPU has no bf16
    w = w_ref[...].astype(jnp.float32)
    out_ref[...] = jnp.sum(v * w[:, :, None], axis=1).astype(out_ref.dtype)


# ------------------------------ Tiling logic ------------------------------- #

_DEFAULT_BUDGET = 12 * 1024 * 1024   # double-buffered working-set cap; fits the
                                     # tightest default scoped VMEM (v5e 16 MiB)


def _vmem_budget_bytes():
    try:
        cap = pltpu.get_tpu_info().vmem_capacity_bytes
    except Exception:
        cap = 64 * 1024 * 1024                     # conservative (v7x physical)
    # Never use more than ~3/8 of physical VMEM, and always fit the default
    # scoped limits so no vmem_limit_bytes override is needed on any generation.
    return min(cap * 3 // 8, _DEFAULT_BUDGET)


def _padded_bytes_per_graph(E, D, v_dtype):
    """Per-graph HBM->VMEM cost in (sublane,128)-padded-tile bytes."""
    v_item = jnp.dtype(v_dtype).itemsize
    v_sub = max(8, 32 // v_item)                   # f32 -> 8, bf16 -> 16, i8 -> 32
    values = _round_up(E, v_sub) * _round_up(D, 128) * v_item
    w_row = _round_up(E, 128) * 4                  # its share of an (8, E) f32 tile
    o_row = _round_up(D, 128) * 4                  # its share of an (8, D) f32 tile
    return values + w_row + o_row


def _pick_batch_tile(B, E, D, v_dtype):
    """Largest batch tile (multiple of 8) whose double-buffered, tile-padded
    working set fits the VMEM budget.  Prefers a tile dividing the 8-padded
    batch (avoids padding values in HBM) but never shrinks below 3/4 of the
    budget-optimal size, so an awkward B cannot collapse the DMA size."""
    budget = _vmem_budget_bytes()
    per_graph = _padded_bytes_per_graph(E, D, v_dtype)
    bt = (budget // 2) // per_graph                # x2: Pallas double-buffers
    bt = max(8, (bt // 8) * 8)
    b8 = _round_up(B, 8)
    bt = min(bt, b8)
    for cand in range(bt, max(8, bt * 3 // 4) - 1, -8):
        if b8 % cand == 0:
            return cand
    return bt


# ------------------------------- Wrappers ---------------------------------- #

def _avgpool_readout(values, weights):
    """values: (B, E, D) f32 or bf16; weights: (B, E) fused mask*scale.
    Returns (B, D) float32 (accumulation is always f32)."""
    B, E, D = values.shape
    weights = weights.astype(jnp.float32)
    Bt = _pick_batch_tile(B, E, D, values.dtype)
    b_pad = _round_up(B, Bt)
    if b_pad != B:
        # Padded graphs contribute nothing: their weights are zero.
        values = jnp.pad(values, ((0, b_pad - B), (0, 0), (0, 0)))
        weights = jnp.pad(weights, ((0, b_pad - B), (0, 0)))

    cost = pl.CostEstimate(
        flops=2 * b_pad * E * D,
        transcendentals=0,
        bytes_accessed=int(values.size * values.dtype.itemsize
                           + weights.size * 4 + b_pad * D * 4),
    )

    out = pl.pallas_call(
        _avgpool_readout_kernel,
        out_shape=jax.ShapeDtypeStruct((b_pad, D), jnp.float32),
        grid=(b_pad // Bt,),
        in_specs=[
            pl.BlockSpec((Bt, E), lambda b: (b, 0)),        # weights, lane-dense E
            pl.BlockSpec((Bt, E, D), lambda b: (b, 0, 0)),  # values
        ],
        out_specs=pl.BlockSpec((Bt, D), lambda b: (b, 0)),  # dense 2-D output
        compiler_params=pltpu.CompilerParams(dimension_semantics=("parallel",)),
        cost_estimate=cost,
    )(weights, values)
    return out[:B] if b_pad != B else out


def avgpool_order1(values, node_mask, n_nodes):
    """values: (B, N, D), node_mask: (B, N) bool, n_nodes: (B,) int -> (B, D) f32."""
    n_inv = 1.0 / (n_nodes.astype(jnp.float32) + 1e-5)
    w = node_mask.astype(jnp.float32) * n_inv[:, None]            # (B, N)
    return _avgpool_readout(values, w)


def avgpool_order2(values, indices, mask, n_nodes, n_edges):
    """values: (B, E, D), indices: (B, E, 2) int, mask: (B, E) bool,
    n_nodes/n_edges: (B,) int -> (B, D) f32."""
    n_inv = 1.0 / (n_nodes.astype(jnp.float32) + 1e-5)
    e_inv = 1.0 / ((n_edges - n_nodes).astype(jnp.float32) + 1e-5)
    is_diag = indices[..., 0] == indices[..., 1]                   # (B, E)
    scale = jnp.where(is_diag, n_inv[:, None], e_inv[:, None])     # (B, E)
    w = mask.astype(jnp.float32) * scale                           # (B, E)
    return _avgpool_readout(values, w)


# --------------------------------- Main ------------------------------------ #

if __name__ == "__main__":
    key = jax.random.PRNGKey(0)
    k1, k2 = jax.random.split(key)

    B, N, E, D = 2, 8, 24, 32

    # ------------------ order = 1 (node-set readout) ------------------ #
    n_nodes = jnp.array([5, 8], dtype=jnp.int32)
    node_vals = jax.random.normal(k1, (B, N, D), dtype=jnp.float32)
    node_mask = jnp.arange(N)[None, :] < n_nodes[:, None]          # (B, N) bool

    out1 = avgpool_order1(node_vals, node_mask, n_nodes)
    jax.block_until_ready(out1)

    n_inv_ref = 1.0 / (n_nodes.astype(jnp.float32) + 1e-5)
    ref1 = n_inv_ref[:, None] * jnp.sum(node_vals * node_mask[..., None], axis=1)
    assert jnp.allclose(out1, ref1, atol=1e-5, rtol=1e-5)

    # bf16-streamed values path (half the HBM bytes; f32 accumulate in-kernel)
    out1_bf16 = avgpool_order1(node_vals.astype(jnp.bfloat16), node_mask, n_nodes)
    jax.block_until_ready(out1_bf16)
    assert jnp.allclose(out1_bf16, ref1, atol=5e-2, rtol=5e-2)

    # ------------------ order = 2 (edge-set readout) ------------------ #
    # Synthetic sparse indices: per graph, n_nodes diagonal edges (i,i) followed
    # by off-diagonal edges; pad to E and mark valid slots in mask.
    n_nodes_np = np.array([5, 8], dtype=np.int32)
    nondiag_counts = np.array([8, 14], dtype=np.int32)
    n_edges_np = n_nodes_np + nondiag_counts                        # [13, 22] <= E

    idx_np = np.zeros((B, E, 2), dtype=np.int32)
    mask_np = np.zeros((B, E), dtype=bool)
    for b in range(B):
        nn = int(n_nodes_np[b])
        e = 0
        for i in range(nn):                                         # diagonal edges
            idx_np[b, e] = (i, i)
            e += 1
        c = 0
        hop = 1
        while c < int(nondiag_counts[b]):                           # off-diagonal edges
            for i in range(nn):
                if c >= int(nondiag_counts[b]):
                    break
                j = (i + hop) % nn
                if j == i:
                    continue
                idx_np[b, e] = (i, j)
                e += 1
                c += 1
            hop += 1
        mask_np[b, : int(n_edges_np[b])] = True

    indices = jnp.asarray(idx_np)
    mask = jnp.asarray(mask_np)
    n_nodes2 = jnp.asarray(n_nodes_np)
    n_edges2 = jnp.asarray(n_edges_np)
    edge_vals = jax.random.normal(k2, (B, E, D), dtype=jnp.float32)

    out2 = avgpool_order2(edge_vals, indices, mask, n_nodes2, n_edges2)
    jax.block_until_ready(out2)

    # pure-JAX reference mirroring the PyTorch forward
    is_diag = indices[..., 0] == indices[..., 1]
    mf = mask.astype(jnp.float32)[..., None]
    diag_sum = jnp.sum(edge_vals * mf * is_diag[..., None].astype(jnp.float32), axis=1)
    nondiag_sum = jnp.sum(edge_vals * mf * (~is_diag)[..., None].astype(jnp.float32), axis=1)
    n_inv2 = 1.0 / (n_nodes2.astype(jnp.float32) + 1e-5)
    e_inv2 = 1.0 / ((n_edges2 - n_nodes2).astype(jnp.float32) + 1e-5)
    ref2 = n_inv2[:, None] * diag_sum + e_inv2[:, None] * nondiag_sum
    assert jnp.allclose(out2, ref2, atol=1e-5, rtol=1e-5)

    print("KERNEL_OK")
</pallas_src>

<mosaic_0001>
module attributes {stable_mosaic.version = 11 : i64} {
  func.func @_avgpool_readout_kernel(%arg0: i32, %arg1: memref<8x8xf32, #tpu.memory_space<vmem>>, %arg2: memref<8x8x32xf32, #tpu.memory_space<vmem>>, %arg3: memref<8x32xf32, #tpu.memory_space<vmem>>) attributes {dimension_semantics = [#tpu.dimension_semantics<parallel>], iteration_bounds = array<i64: 1>, scalar_prefetch = 0 : i64, scratch_operands = 0 : i64, tpu.core_type = #tpu.core_type<tc>, window_params = [{transform_indices = @transform_0, window_bounds = array<i64: 8, 8>}, {transform_indices = @transform_1, window_bounds = array<i64: 8, 8, 32>}, {transform_indices = @transform_2, window_bounds = array<i64: 8, 32>}]} {
    %c0 = arith.constant 0 : index
    %c0_0 = arith.constant 0 : index
    %c0_1 = arith.constant 0 : index
    %0 = vector.load %arg2[%c0, %c0_0, %c0_1] : memref<8x8x32xf32, #tpu.memory_space<vmem>>, vector<8x8x32xf32>
    %c0_2 = arith.constant 0 : index
    %c0_3 = arith.constant 0 : index
    %1 = vector.load %arg1[%c0_2, %c0_3] : memref<8x8xf32, #tpu.memory_space<vmem>>, vector<8x8xf32>
    %2 = vector.shape_cast %1 : vector<8x8xf32> to vector<8x8x1xf32>
    %3 = vector.broadcast %2 : vector<8x8x1xf32> to vector<8x8x32xf32>
    %4 = arith.mulf %0, %3 : vector<8x8x32xf32>
    %cst = arith.constant dense<0.000000e+00> : vector<8x32xf32>
    %5 = vector.multi_reduction <add>, %4, %cst [1] : vector<8x8x32xf32> to vector<8x32xf32>
    %c0_4 = arith.constant 0 : index
    %c0_5 = arith.constant 0 : index
    %6 = vector.load %arg3[%c0_4, %c0_5] : memref<8x32xf32, #tpu.memory_space<vmem>>, vector<8x32xf32>
    tpu.vector_store %arg3[%c0_4, %c0_5], %5 {strides = array<i32>} : memref<8x32xf32, #tpu.memory_space<vmem>>, vector<8x32xf32>,
    return
  }
  func.func @transform_0(%arg0: i32) -> (i32, i32) {
    %c0_i32 = arith.constant 0 : i32
    %c0_i32_0 = arith.constant 0 : i32
    return %arg0, %c0_i32 : i32, i32
  }
  func.func @transform_1(%arg0: i32) -> (i32, i32, i32) {
    %c0_i32 = arith.constant 0 : i32
    %c0_i32_0 = arith.constant 0 : i32
    %c0_i32_1 = arith.constant 0 : i32
    return %arg0, %c0_i32, %c0_i32_0 : i32, i32, i32
  }
  func.func @transform_2(%arg0: i32) -> (i32, i32) {
    %c0_i32 = arith.constant 0 : i32
    %c0_i32_0 = arith.constant 0 : i32
    return %arg0, %c0_i32 : i32, i32
  }
}

</mosaic_0001>

<llo_original>
// kernel: tpu_custom_call.1
$region0: #{tpu_custom_call.1}
  #allocation0 [shape = 'u32[]', space=smem, size = 0x4, offset = 0x4, fixed_abs, tag = 'smem constant byte address 0x4 - core index']
  #allocation1 [shape = 'u32[72,128]{1,0:T(1,128)}', space=vmem, size = 0x9000, scoped, tag = 'internal scratch']
  %s0 = inlined_call_operand.hbm [shape: f32[8,8], index: 0, kind: input, shape index: {}]
  %s1 = inlined_call_operand.hbm [shape: f32[8,8,32], index: 1, kind: input, shape index: {}]
  %s2 = inlined_call_operand.hbm [shape: f32[8,32], index: 2, kind: output, shape index: {}]
  %s3 = sld [smem:[#allocation0]]
  $region26: #{tpu_custom_call.1} parent=0
    _
  %s5 = ssub.s32 1, %s3
  %s6 = scalar_select 0, %s5, %s3
  $region1: #{tpu_custom_call.1} parent=0
    #allocation2 [shape = 'u8[4096]{0}', space=vmem, size = 0x1000, scoped, tag = 'input window, operand 0, single buffered']
    #allocation3 [shape = 's32[1]{0}', space=sflag, size = 0x4, scoped, tag = 'scoped memory for tpu_custom_call.1']
    #allocation4 [shape = 's32[1]{0}', space=sflag, size = 0x4, scoped, tag = 'scoped memory for tpu_custom_call.1']
    #allocation5 [shape = 'u8[32768]{0}', space=vmem, size = 0x8000, scoped, tag = 'input window, operand 1, single buffered']
    #allocation6 [shape = 's32[1]{0}', space=sflag, size = 0x4, scoped, tag = 'scoped memory for tpu_custom_call.1']
    #allocation7 [shape = 'u8[4096]{0}', space=vmem, size = 0x1000, scoped, tag = 'output window, operand 0, single buffered']
    %7 = vsyncpa [#allocation3], 0
    %8 = vsyncpa [#allocation6], 0
    %9 = vsyncpa [#allocation4], 0
    // Predicated region
    $region2: #{tpu_custom_call.1} parent=1 // pred_check
      _
    $region3: #{tpu_custom_call.1} parent=1 // pred_check_branch
      %11 = sbr.rel (0) target = $region5
    $region4: #{tpu_custom_call.1} parent=1 // pred_region
      %13 = vsyncadd [#allocation3], 0
      %s15 = sshll.u32 %s0, 4
      %s16 = int_to_ptr.hbm [resolvable:$true] %s15
      %s17 = sshll.u32 [#allocation2], 4
      %s18 = int_to_ptr.vmem [resolvable:$true] %s17
      %20 = dma.hbm_to_vmem [thread:$0]  %s16, 128, %s18, [#allocation3]
    $region5: #{tpu_custom_call.1} parent=1 // pred_fallthru
      _
    // Predicated region
    $region6: #{tpu_custom_call.1} parent=1 // pred_check
      _
    $region7: #{tpu_custom_call.1} parent=1 // pred_check_branch
      %22 = sbr.rel (0) target = $region9
    $region8: #{tpu_custom_call.1} parent=1 // pred_region
      %24 = vsyncadd [#allocation6], 0
      %s25 = sshll.u32 %s1, 4
      %s26 = int_to_ptr.hbm [resolvable:$true] %s25
      %s27 = sshll.u32 [#allocation5], 4
      %s28 = int_to_ptr.vmem [resolvable:$true] %s27
      %33 = dma.hbm_to_vmem [thread:$0]  %s26, 1024, %s28, [#allocation6], 128, 128, 8
    $region9: #{tpu_custom_call.1} parent=1 // pred_fallthru
      _
    // Predicated region
    $region10: #{tpu_custom_call.1} parent=1 // pred_check
      _
    $region11: #{tpu_custom_call.1} parent=1 // pred_check_branch
      %35 = sbr.rel (0) target = $region13
    $region12: #{tpu_custom_call.1} parent=1 // pred_region
      %37 = dma.done [#allocation3], 128
    $region13: #{tpu_custom_call.1} parent=1 // pred_fallthru
      _
    // Predicated region
    $region14: #{tpu_custom_call.1} parent=1 // pred_check
      _
    $region15: #{tpu_custom_call.1} parent=1 // pred_check_branch
      %39 = sbr.rel (0) target = $region17
    $region16: #{tpu_custom_call.1} parent=1 // pred_region
      %41 = dma.done [#allocation6], 1024
    $region17: #{tpu_custom_call.1} parent=1 // pred_fallthru
      _
    %v42 = vld [vmem:[#allocation5] sm:$0xff]
    %v43 = vld [vmem:[#allocation5 + $0x8] sm:$0xff]
    %v44 = vld [vmem:[#allocation5 + $0x10] sm:$0xff]
    %v45 = vld [vmem:[#allocation5 + $0x18] sm:$0xff]
    %v46 = vld [vmem:[#allocation5 + $0x20] sm:$0xff]
    %v47 = vld [vmem:[#allocation5 + $0x28] sm:$0xff]
    %v48 = vld [vmem:[#allocation5 + $0x30] sm:$0xff]
    %v49 = vld [vmem:[#allocation5 + $0x38] sm:$0xff]
    %v50 = vld [vmem:[#allocation2] sm:$0xff]
    %v51 = vperm.slane %v50, 0
    %v52 = vlaneseq
    %v53 = vshrl.u32 %v52, 7
    %55 = vset.pattern.permute.xlu0 %v53
    %56 = vperm.xlu0 %55, %v51
    %v57 = vpop.permute.xlu0 %56
    %v58 = vperm.slane %v50, 1
    %v59 = vlaneseq
    %v60 = vshrl.u32 %v59, 7
    %62 = vset.pattern.permute.xlu0 %v60
    %63 = vperm.xlu0 %62, %v58
    %v64 = vpop.permute.xlu0 %63
    %v65 = vperm.slane %v50, 2
    %v66 = vlaneseq
    %v67 = vshrl.u32 %v66, 7
    %69 = vset.pattern.permute.xlu0 %v67
    %70 = vperm.xlu0 %69, %v65
    %v71 = vpop.permute.xlu0 %70
    %v72 = vperm.slane %v50, 3
    %v73 = vlaneseq
    %v74 = vshrl.u32 %v73, 7
    %76 = vset.pattern.permute.xlu0 %v74
    %77 = vperm.xlu0 %76, %v72
    %v78 = vpop.permute.xlu0 %77
    %v79 = vperm.slane %v50, 4
    %v80 = vlaneseq
    %v81 = vshrl.u32 %v80, 7
    %83 = vset.pattern.permute.xlu0 %v81
    %84 = vperm.xlu0 %83, %v79
    %v85 = vpop.permute.xlu0 %84
    %v86 = vperm.slane %v50, 5
    %v87 = vlaneseq
    %v88 = vshrl.u32 %v87, 7
    %90 = vset.pattern.permute.xlu0 %v88
    %91 = vperm.xlu0 %90, %v86
    %v92 = vpop.permute.xlu0 %91
    %v93 = vperm.slane %v50, 6
    %v94 = vlaneseq
    %v95 = vshrl.u32 %v94, 7
    %97 = vset.pattern.permute.xlu0 %v95
    %98 = vperm.xlu0 %97, %v93
    %v99 = vpop.permute.xlu0 %98
    %v100 = vperm.slane %v50, 7
    %v101 = vlaneseq
    %v102 = vshrl.u32 %v101, 7
    %104 = vset.pattern.permute.xlu0 %v102
    %105 = vperm.xlu0 %104, %v100
    %v106 = vpop.permute.xlu0 %105
    %v107 = vmul.f32 %v42, %v57
    %v108 = vmul.f32 %v43, %v64
    %v109 = vmul.f32 %v44, %v71
    %v110 = vmul.f32 %v45, %v78
    %v111 = vmul.f32 %v46, %v85
    %v112 = vmul.f32 %v47, %v92
    %v113 = vmul.f32 %v48, %v99
    %v114 = vmul.f32 %v49, %v106
    %vm115 = vcmask 261120
    %v116 = vsel %vm115, %v107, 0.0
    %v117 = vrot.slane %v116, 4
    %v118 = vadd.f32 %v116, %v117
    %v119 = vrot.slane %v118, 2
    %v120 = vadd.f32 %v118, %v119
    %v121 = vrot.slane %v120, 1
    %v122 = vadd.f32 %v120, %v121
    %v123 = vsel %vm115, %v108, 0.0
    %v124 = vrot.slane %v123, 4
    %v125 = vadd.f32 %v123, %v124
    %v126 = vrot.slane %v125, 2
    %v127 = vadd.f32 %v125, %v126
    %v128 = vrot.slane %v127, 1
    %v129 = vadd.f32 %v127, %v128
    %v130 = vsel %vm115, %v109, 0.0
    %v131 = vrot.slane %v130, 4
    %v132 = vadd.f32 %v130, %v131
    %v133 = vrot.slane %v132, 2
    %v134 = vadd.f32 %v132, %v133
    %v135 = vrot.slane %v134, 1
    %v136 = vadd.f32 %v134, %v135
    %v137 = vsel %vm115, %v110, 0.0
    %v138 = vrot.slane %v137, 4
    %v139 = vadd.f32 %v137, %v138
    %v140 = vrot.slane %v139, 2
    %v141 = vadd.f32 %v139, %v140
    %v142 = vrot.slane %v141, 1
    %v143 = vadd.f32 %v141, %v142
    %v144 = vsel %vm115, %v111, 0.0
    %v145 = vrot.slane %v144, 4
    %v146 = vadd.f32 %v144, %v145
    %v147 = vrot.slane %v146, 2
    %v148 = vadd.f32 %v146, %v147
    %v149 = vrot.slane %v148, 1
    %v150 = vadd.f32 %v148, %v149
    %v151 = vsel %vm115, %v112, 0.0
    %v152 = vrot.slane %v151, 4
    %v153 = vadd.f32 %v151, %v152
    %v154 = vrot.slane %v153, 2
    %v155 = vadd.f32 %v153, %v154
    %v156 = vrot.slane %v155, 1
    %v157 = vadd.f32 %v155, %v156
    %v158 = vsel %vm115, %v113, 0.0
    %v159 = vrot.slane %v158, 4
    %v160 = vadd.f32 %v158, %v159
    %v161 = vrot.slane %v160, 2
    %v162 = vadd.f32 %v160, %v161
    %v163 = vrot.slane %v162, 1
    %v164 = vadd.f32 %v162, %v163
    %v165 = vsel %vm115, %v114, 0.0
    %v166 = vrot.slane %v165, 4
    %v167 = vadd.f32 %v165, %v166
    %v168 = vrot.slane %v167, 2
    %v169 = vadd.f32 %v167, %v168
    %v170 = vrot.slane %v169, 1
    %v171 = vadd.f32 %v169, %v170
    %vm180 = vcmask 1041409
    %v181 = vsel %vm180, %v129, %v122
    %vm182 = vcmask 1042434
    %v183 = vsel %vm182, %v136, %v181
    %vm184 = vcmask 1043459
    %v185 = vsel %vm184, %v143, %v183
    %vm186 = vcmask 1044484
    %v187 = vsel %vm186, %v150, %v185
    %vm188 = vcmask 1045509
    %v189 = vsel %vm188, %v157, %v187
    %vm190 = vcmask 1046534
    %v191 = vsel %vm190, %v164, %v189
    %vm192 = vcmask 1047559
    %v193 = vsel %vm192, %v171, %v191
    %195 = vst.msk [vmem:[#allocation7] sm:$0xff] %vm115, %v193
    // Predicated region
    $region18: #{tpu_custom_call.1} parent=1 // pred_check
      _
    $region19: #{tpu_custom_call.1} parent=1 // pred_check_branch
      %197 = sbr.rel (0) target = $region21
    $region20: #{tpu_custom_call.1} parent=1 // pred_region
      %199 = vsyncadd [#allocation4], 0
      %s201 = sshll.u32 [#allocation7], 4
      %s202 = int_to_ptr.vmem [resolvable:$true] %s201
      %s203 = sshll.u32 %s2, 4
      %s204 = int_to_ptr.hbm [resolvable:$true] %s203
      %206 = dma.vmem_to_hbm [thread:$0]  %s202, 128, %s204, [#allocation4]
    $region21: #{tpu_custom_call.1} parent=1 // pred_fallthru
      _
    // Predicated region
    $region22: #{tpu_custom_call.1} parent=1 // pred_check
      _
    $region23: #{tpu_custom_call.1} parent=1 // pred_check_branch
      %208 = sbr.rel (0) target = $region25
    $region24: #{tpu_custom_call.1} parent=1 // pred_region
      %210 = dma.done [#allocation4], 128
    $region25: #{tpu_custom_call.1} parent=1 // pred_fallthru
      _
    %211 = vsyncpa [#allocation3], 1
    %212 = vsyncpa [#allocation6], 1
    %213 = vsyncpa [#allocation4], 1

</llo_original>
